<compile_context>
chip_gen: v7x
topology: tpu7x:2x2x1
jax: 0.10.0
libtpu: 0.0.40
codegen_flags: <defaults>
</compile_context>

<pallas_src>
import math

import jax
import jax.numpy as jnp
from jax import lax
from jax.experimental import pallas as pl
from jax.experimental.pallas import tpu as pltpu

EPS = 1e-6

_LANE = 128
_SUBLANE = 8
_MAX_CARRY_ELEMS = 8192            # rows*chunk held in vregs (2 carries ~= 16 vregs)
_MIN_PALLAS_ELEMS = 1024           # below this, the pallas_call overhead dominates
_DEFAULT_VMEM_CAP = 64 * 1024 * 1024   # v7x per-core VMEM; conservative default


def _cdiv(a, b):
    return -(-a // b)


def _round_up(x, m):
    return _cdiv(x, m) * m


def _tpu_params():
    """Best-effort (vmem_capacity_bytes, cores_per_chip) with safe fallbacks."""
    vmem_cap = _DEFAULT_VMEM_CAP
    ncores = 1
    try:
        info = pltpu.get_tpu_info()
    except Exception:
        info = None
    if info is not None:
        try:
            cap = int(getattr(info, "vmem_capacity_bytes"))
            if cap > 0:
                vmem_cap = cap
        except Exception:
            pass
        for name in ("num_cores", "num_tensorcores", "tensorcore_count", "cores_per_chip"):
            try:
                v = int(getattr(info, name))
            except Exception:
                continue
            if v > 1:
                ncores = min(2, v)      # a 2-way "parallel" split is all we use
                break
    return vmem_cap, ncores


def _make_dice_kernel(rows, tk, chunk, per_row, n_inner, needs_mask, carry_in_vregs):
    """Single-pass streaming reduction over one (rows, tk) lane tile."""
    n_chunks = tk // chunk

    def kernel(x_ref, t_ref, inter_ref, card_ref):
        k = pl.program_id(1)

        @pl.when(k == 0)
        def _():
            inter_ref[...] = jnp.zeros_like(inter_ref)
            card_ref[...] = jnp.zeros_like(card_ref)

        if needs_mask:
            tile = pl.program_id(0) * n_inner + k
            limit = per_row - tile * tk                     # valid lanes in this tile
            lane = lax.broadcasted_iota(jnp.int32, (rows, chunk), 1)

        def load_chunk(i):
            off = pl.multiple_of(i * chunk, chunk)
            xs = x_ref[:, pl.ds(off, chunk)].astype(jnp.float32)
            ts = t_ref[:, pl.ds(off, chunk)].astype(jnp.float32)
            if needs_mask:
                # Mask BOTH operands: out-of-bounds block contents are garbage
                # and sum(x + t) is not garbage-safe.
                valid = lane < (limit - off)
                xs = jnp.where(valid, xs, 0.0)
                ts = jnp.where(valid, ts, 0.0)
            return xs, ts

        if carry_in_vregs:
            zeros = jnp.zeros((rows, chunk), jnp.float32)

            def body(i, carry):
                acc_i, acc_c = carry
                xs, ts = load_chunk(i)
                return acc_i + xs * ts, acc_c + xs + ts

            acc_i, acc_c = lax.fori_loop(0, n_chunks, body, (zeros, zeros))
            inter_ref[...] += acc_i[None]
            card_ref[...] += acc_c[None]
        else:
            # Large `rows`: accumulate straight into the VMEM-resident outputs.
            @pl.loop(0, n_chunks)
            def _(i):
                xs, ts = load_chunk(i)
                inter_ref[...] += (xs * ts)[None]
                card_ref[...] += (xs + ts)[None]

    return kernel


def dice_loss_ref(inp, target):
    dims = (1, 2, 3)
    intersection = jnp.sum(inp * target, dims)
    cardinality = jnp.sum(inp + target, dims)
    dice_score = 2.0 * intersection / (cardinality + EPS)
    return jnp.mean(1.0 - dice_score)


def dice_loss(inp, target):
    """Dice loss matching DiceLoss.forward (BxNxHxW inputs, scalar output)."""
    if inp.ndim != 4:
        raise ValueError(f"Invalid input shape, we expect BxNxHxW. Got: {inp.shape}")
    if inp.shape != target.shape:
        raise ValueError(
            f"input and target shapes must be the same. Got: {inp.shape} and {target.shape}")

    B, C, H, W = inp.shape
    K = C * H * W

    if B * K < _MIN_PALLAS_ELEMS:
        # Tiny shapes: fixed pallas_call overhead dominates — plain JAX is faster.
        return dice_loss_ref(inp, target)

    # ---- layout: free reshapes only (never jnp.pad / strided slice via HBM) ----
    R = _SUBLANE // math.gcd(B, _SUBLANE)        # sublane packing factor
    if K % R != 0:
        R = 1                                    # packing would need a pad -> skip it
    rows = B * R
    per_row = K // R
    x = inp.reshape(rows, per_row)
    t = target.reshape(rows, per_row)

    isz_x = jnp.dtype(inp.dtype).itemsize
    isz_t = jnp.dtype(target.dtype).itemsize
    rows_v = _round_up(rows, _SUBLANE)           # VMEM sublane granularity

    vmem_cap, ncores = _tpu_params()
    # Spend at most ~5/8 of VMEM on the 4 streaming buffers (2 inputs x 2 stages),
    # capped at 16 MiB per input per buffer.
    per_buf_budget = max(1 << 20, min(16 << 20, (vmem_cap * 5 // 8) // 4))

    # Lanes processed per inner-loop step (single pass over x and t).
    chunk = max(_LANE, min(1024, (_MAX_CARRY_ELEMS // rows) // _LANE * _LANE))
    chunk = min(chunk, _round_up(per_row, _LANE))
    carry_in_vregs = rows * chunk <= _MAX_CARRY_ELEMS

    tk_budget = max(chunk,
                    (per_buf_budget // (rows_v * max(isz_x, isz_t))) // chunk * chunk)

    # Plan (ncores, tk, n_inner) so every lane tile starts inside the array
    # (DMAs stay in bounds); the 2-way core split falls back to 1 if it can't.
    n_inner = 1
    tk = tk_budget
    for nc in ([ncores] if ncores > 1 else []) + [1]:
        n_tiles = nc * max(1, _cdiv(_cdiv(per_row, tk_budget), nc))
        tk = min(tk_budget, _round_up(_cdiv(per_row, n_tiles), chunk))
        if (n_tiles - 1) * tk < per_row:
            ncores, n_inner = nc, n_tiles // nc
            break
    needs_mask = ncores * n_inner * tk != per_row

    kernel = _make_dice_kernel(rows, tk, chunk, per_row, n_inner, needs_mask,
                               carry_in_vregs)

    in_spec = pl.BlockSpec((rows, tk), lambda c, k: (0, c * n_inner + k))
    out_spec = pl.BlockSpec((1, rows, chunk), lambda c, k: (c, 0, 0))

    buf_bytes = rows_v * tk * (isz_x + isz_t)            # one pipeline stage, both inputs
    vmem_limit = int(min(vmem_cap * 9 // 10,
                         max(32 << 20, 2 * buf_bytes + (4 << 20))))

    cost = pl.CostEstimate(
        flops=4 * rows * per_row,
        transcendentals=0,
        bytes_accessed=rows * per_row * (isz_x + isz_t) + 2 * ncores * rows * chunk * 4,
    )

    inter, card = pl.pallas_call(
        kernel,
        out_shape=(
            jax.ShapeDtypeStruct((ncores, rows, chunk), jnp.float32),
            jax.ShapeDtypeStruct((ncores, rows, chunk), jnp.float32),
        ),
        grid_spec=pltpu.PrefetchScalarGridSpec(
            num_scalar_prefetch=0,
            grid=(ncores, n_inner),
            in_specs=[in_spec, in_spec],
            out_specs=[out_spec, out_spec],
        ),
        compiler_params=pltpu.CompilerParams(
            dimension_semantics=("parallel", "arbitrary"),
            vmem_limit_bytes=vmem_limit,
        ),
        cost_estimate=cost,
    )(x, t)

    # Tiny epilogue in plain JAX: fold cores, packed sub-rows and lanes per
    # batch, then finish the dice score (negligible vs. the streaming pass).
    inter_b = inter.reshape(ncores, B, R, chunk).sum(axis=(0, 2, 3))
    card_b = card.reshape(ncores, B, R, chunk).sum(axis=(0, 2, 3))
    dice = 2.0 * inter_b / (card_b + EPS)
    return jnp.mean(1.0 - dice)


if __name__ == "__main__":
    key = jax.random.PRNGKey(0)
    k1, k2 = jax.random.split(key)
    B, C, H, W = 2, 4, 16, 16
    # probability-like inputs, as typically fed to a dice loss
    inp = jax.nn.sigmoid(jax.random.normal(k1, (B, C, H, W), dtype=jnp.float32))
    tgt = (jax.random.uniform(k2, (B, C, H, W), dtype=jnp.float32) > 0.5).astype(
        jnp.float32
    )

    out = dice_loss(inp, tgt)
    out = jax.block_until_ready(out)

    ref = dice_loss_ref(inp, tgt)
    assert jnp.allclose(out, ref, rtol=1e-5, atol=1e-5), (out, ref)
    print("KERNEL_OK")
</pallas_src>

<mosaic_0001>
module attributes {stable_mosaic.version = 11 : i64} {
  func.func @kernel(%arg0: i32, %arg1: i32, %arg2: memref<8x256xf32, #tpu.memory_space<vmem>>, %arg3: memref<8x256xf32, #tpu.memory_space<vmem>>, %arg4: memref<1x8x256xf32, #tpu.memory_space<vmem>>, %arg5: memref<1x8x256xf32, #tpu.memory_space<vmem>>) attributes {dimension_semantics = [#tpu.dimension_semantics<parallel>, #tpu.dimension_semantics<arbitrary>], iteration_bounds = array<i64: 1, 1>, scalar_prefetch = 0 : i64, scratch_operands = 0 : i64, tpu.core_type = #tpu.core_type<tc>, window_params = [{transform_indices = @transform_0, window_bounds = array<i64: 8, 256>}, {transform_indices = @transform_1, window_bounds = array<i64: 8, 256>}, {transform_indices = @transform_2, window_bounds = array<i64: 1, 8, 256>}, {transform_indices = @transform_3, window_bounds = array<i64: 1, 8, 256>}]} {
    %c0_i32 = arith.constant 0 : i32
    %0 = arith.cmpi eq, %arg1, %c0_i32 : i32
    %1 = arith.extui %0 : i1 to i32
    %c0_i32_0 = arith.constant 0 : i32
    %2 = arith.cmpi ne, %1, %c0_i32_0 : i32
    scf.if %2 {
      %cst_15 = arith.constant 0.000000e+00 : f32
      %22 = vector.broadcast %cst_15 : f32 to vector<1x8x256xf32>
      %c0_16 = arith.constant 0 : index
      %c0_17 = arith.constant 0 : index
      %c0_18 = arith.constant 0 : index
      %23 = vector.load %arg4[%c0_16, %c0_17, %c0_18] : memref<1x8x256xf32, #tpu.memory_space<vmem>>, vector<1x8x256xf32>
      tpu.vector_store %arg4[%c0_16, %c0_17, %c0_18], %22 {strides = array<i32>} : memref<1x8x256xf32, #tpu.memory_space<vmem>>, vector<1x8x256xf32>,
      %cst_19 = arith.constant 0.000000e+00 : f32
      %24 = vector.broadcast %cst_19 : f32 to vector<1x8x256xf32>
      %c0_20 = arith.constant 0 : index
      %c0_21 = arith.constant 0 : index
      %c0_22 = arith.constant 0 : index
      %25 = vector.load %arg5[%c0_20, %c0_21, %c0_22] : memref<1x8x256xf32, #tpu.memory_space<vmem>>, vector<1x8x256xf32>
      tpu.vector_store %arg5[%c0_20, %c0_21, %c0_22], %24 {strides = array<i32>} : memref<1x8x256xf32, #tpu.memory_space<vmem>>, vector<1x8x256xf32>,
    } else {
    }
    %cst = arith.constant 0.000000e+00 : f32
    %3 = vector.broadcast %cst : f32 to vector<8x256xf32>
    %c0_i32_1 = arith.constant 0 : i32
    %c256_i32 = arith.constant 256 : i32
    %4 = arith.muli %c0_i32_1, %c256_i32 : i32
    %5 = tpu.assume_multiple %4, 256 : i32
    %c0 = arith.constant 0 : index
    %6 = arith.index_cast %5 : i32 to index
    %7 = vector.load %arg2[%c0, %6] : memref<8x256xf32, #tpu.memory_space<vmem>>, vector<8x256xf32>
    %c0_2 = arith.constant 0 : index
    %8 = arith.index_cast %5 : i32 to index
    %9 = vector.load %arg3[%c0_2, %8] : memref<8x256xf32, #tpu.memory_space<vmem>>, vector<8x256xf32>
    %10 = arith.mulf %7, %9 : vector<8x256xf32>
    %11 = arith.addf %3, %10 : vector<8x256xf32>
    %12 = arith.addf %3, %7 : vector<8x256xf32>
    %13 = arith.addf %12, %9 : vector<8x256xf32>
    %c1_i32 = arith.constant 1 : i32
    %c0_3 = arith.constant 0 : index
    %c0_4 = arith.constant 0 : index
    %c0_5 = arith.constant 0 : index
    %14 = vector.load %arg4[%c0_3, %c0_4, %c0_5] : memref<1x8x256xf32, #tpu.memory_space<vmem>>, vector<1x8x256xf32>
    %15 = vector.shape_cast %11 : vector<8x256xf32> to vector<1x8x256xf32>
    %16 = arith.addf %14, %15 : vector<1x8x256xf32>
    %c0_6 = arith.constant 0 : index
    %c0_7 = arith.constant 0 : index
    %c0_8 = arith.constant 0 : index
    %17 = vector.load %arg4[%c0_6, %c0_7, %c0_8] : memref<1x8x256xf32, #tpu.memory_space<vmem>>, vector<1x8x256xf32>
    tpu.vector_store %arg4[%c0_6, %c0_7, %c0_8], %16 {strides = array<i32>} : memref<1x8x256xf32, #tpu.memory_space<vmem>>, vector<1x8x256xf32>,
    %c0_9 = arith.constant 0 : index
    %c0_10 = arith.constant 0 : index
    %c0_11 = arith.constant 0 : index
    %18 = vector.load %arg5[%c0_9, %c0_10, %c0_11] : memref<1x8x256xf32, #tpu.memory_space<vmem>>, vector<1x8x256xf32>
    %19 = vector.shape_cast %13 : vector<8x256xf32> to vector<1x8x256xf32>
    %20 = arith.addf %18, %19 : vector<1x8x256xf32>
    %c0_12 = arith.constant 0 : index
    %c0_13 = arith.constant 0 : index
    %c0_14 = arith.constant 0 : index
    %21 = vector.load %arg5[%c0_12, %c0_13, %c0_14] : memref<1x8x256xf32, #tpu.memory_space<vmem>>, vector<1x8x256xf32>
    tpu.vector_store %arg5[%c0_12, %c0_13, %c0_14], %20 {strides = array<i32>} : memref<1x8x256xf32, #tpu.memory_space<vmem>>, vector<1x8x256xf32>,
    return
  }
  func.func @transform_0(%arg0: i32, %arg1: i32) -> (i32, i32) {
    %c1_i32 = arith.constant 1 : i32
    %0 = arith.muli %arg0, %c1_i32 : i32
    %1 = arith.addi %0, %arg1 : i32
    %c0_i32 = arith.constant 0 : i32
    %c0_i32_0 = arith.constant 0 : i32
    return %c0_i32, %1 : i32, i32
  }
  func.func @transform_1(%arg0: i32, %arg1: i32) -> (i32, i32) {
    %c1_i32 = arith.constant 1 : i32
    %0 = arith.muli %arg0, %c1_i32 : i32
    %1 = arith.addi %0, %arg1 : i32
    %c0_i32 = arith.constant 0 : i32
    %c0_i32_0 = arith.constant 0 : i32
    return %c0_i32, %1 : i32, i32
  }
  func.func @transform_2(%arg0: i32, %arg1: i32) -> (i32, i32, i32) {
    %c0_i32 = arith.constant 0 : i32
    %c0_i32_0 = arith.constant 0 : i32
    %c0_i32_1 = arith.constant 0 : i32
    return %arg0, %c0_i32, %c0_i32_0 : i32, i32, i32
  }
  func.func @transform_3(%arg0: i32, %arg1: i32) -> (i32, i32, i32) {
    %c0_i32 = arith.constant 0 : i32
    %c0_i32_0 = arith.constant 0 : i32
    %c0_i32_1 = arith.constant 0 : i32
    return %arg0, %c0_i32, %c0_i32_0 : i32, i32, i32
  }
}

</mosaic_0001>

<llo_original>
// kernel: tpu_custom_call.1
$region0: #{tpu_custom_call.1}
  #allocation0 [shape = 'u32[]', space=smem, size = 0x4, offset = 0x4, fixed_abs, tag = 'smem constant byte address 0x4 - core index']
  #allocation1 [shape = 'u32[144,128]{1,0:T(1,128)}', space=vmem, size = 0x12000, scoped, tag = 'internal scratch']
  %s0 = inlined_call_operand.hbm [shape: f32[8,256], index: 0, kind: input, shape index: {}]
  %s1 = inlined_call_operand.hbm [shape: f32[8,256], index: 1, kind: input, shape index: {}]
  %s2 = inlined_call_operand.hbm [shape: f32[1,8,256], index: 2, kind: output, shape index: {0}]
  %s3 = inlined_call_operand.hbm [shape: f32[1,8,256], index: 3, kind: output, shape index: {1}]
  %4 = xla_tuple %s2, %s3
  %s5 = sld [smem:[#allocation0]]
  $region38: #{tpu_custom_call.1} parent=0
    _
  %s7 = ssub.s32 1, %s5
  %s8 = scalar_select 0, %s7, %s5
  $region1: #{tpu_custom_call.1} parent=0
    #allocation2 [shape = 'u8[8192]{0}', space=vmem, size = 0x2000, scoped, tag = 'input window, operand 0, single buffered']
    #allocation3 [shape = 's32[1]{0}', space=sflag, size = 0x4, scoped, tag = 'scoped memory for tpu_custom_call.1']
    #allocation4 [shape = 's32[1]{0}', space=sflag, size = 0x4, scoped, tag = 'scoped memory for tpu_custom_call.1']
    #allocation5 [shape = 'u8[8192]{0}', space=vmem, size = 0x2000, scoped, tag = 'input window, operand 1, single buffered']
    #allocation6 [shape = 's32[1]{0}', space=sflag, size = 0x4, scoped, tag = 'scoped memory for tpu_custom_call.1']
    #allocation7 [shape = 'u8[8192]{0}', space=vmem, size = 0x2000, scoped, tag = 'output window, operand 0, single buffered']
    #allocation8 [shape = 'u8[8192]{0}', space=vmem, size = 0x2000, scoped, tag = 'output window, operand 1, single buffered']
    #allocation9 [shape = 's32[1]{0}', space=sflag, size = 0x4, scoped, tag = 'scoped memory for tpu_custom_call.1']
    %9 = vsyncpa [#allocation3], 0
    %10 = vsyncpa [#allocation6], 0
    %11 = vsyncpa [#allocation4], 0
    %12 = vsyncpa [#allocation9], 0
    // Predicated region
    $region2: #{tpu_custom_call.1} parent=1 // pred_check
      _
    $region3: #{tpu_custom_call.1} parent=1 // pred_check_branch
      %14 = sbr.rel (0) target = $region5
    $region4: #{tpu_custom_call.1} parent=1 // pred_region
      %s15 = sadd.s32 0, 0
      %s16 = smul.u32 2, %s15
      %s18 = ssub.s32 256, 256
      %19 = vsyncadd [#allocation3], %s18
      %s20 = smul.addr %s16, 128
      %s21 = scalar_lea.hbm %s0, %s20
      %s23 = sshll.u32 [#allocation2], 4
      %s24 = int_to_ptr.vmem [resolvable:$true] %s23
      %26 = dma.hbm_to_vmem [thread:$0]  %s21, 256, %s24, [#allocation3]
    $region5: #{tpu_custom_call.1} parent=1 // pred_fallthru
      _
    // Predicated region
    $region6: #{tpu_custom_call.1} parent=1 // pred_check
      _
    $region7: #{tpu_custom_call.1} parent=1 // pred_check_branch
      %28 = sbr.rel (0) target = $region9
    $region8: #{tpu_custom_call.1} parent=1 // pred_region
      %s29 = sadd.s32 0, 0
      %s30 = smul.u32 2, %s29
      %s32 = ssub.s32 256, 256
      %33 = vsyncadd [#allocation6], %s32
      %s34 = smul.addr %s30, 128
      %s35 = scalar_lea.hbm %s1, %s34
      %s37 = sshll.u32 [#allocation5], 4
      %s38 = int_to_ptr.vmem [resolvable:$true] %s37
      %40 = dma.hbm_to_vmem [thread:$0]  %s35, 256, %s38, [#allocation6]
    $region9: #{tpu_custom_call.1} parent=1 // pred_fallthru
      _
    // Predicated region
    $region10: #{tpu_custom_call.1} parent=1 // pred_check
      _
    $region11: #{tpu_custom_call.1} parent=1 // pred_check_branch
      %42 = sbr.rel (0) target = $region13
    $region12: #{tpu_custom_call.1} parent=1 // pred_region
      %43 = dma.done [#allocation3], 256
    $region13: #{tpu_custom_call.1} parent=1 // pred_fallthru
      _
    // Predicated region
    $region14: #{tpu_custom_call.1} parent=1 // pred_check
      _
    $region15: #{tpu_custom_call.1} parent=1 // pred_check_branch
      %45 = sbr.rel (0) target = $region17
    $region16: #{tpu_custom_call.1} parent=1 // pred_region
      %46 = dma.done [#allocation6], 256
    $region17: #{tpu_custom_call.1} parent=1 // pred_fallthru
      _
    %s47 = sadd.s32 0, 0
    %s48 = smul.u32 2, %s47
    %s49 = sadd.s32 0, 0
    %s50 = smul.u32 2, %s49
    %p51 = scmp.eq.s32.totalorder 0, 0
    // Predicated region
    $region18: #{tpu_custom_call.1} parent=1 // pred_check
      %p52 = pneg %p51
    $region19: #{tpu_custom_call.1} parent=1 // pred_check_branch
      %54 = sbr.rel (%p52) target = $region21
    $region20: #{tpu_custom_call.1} parent=1 // pred_region
      %55 = vst [vmem:[#allocation7] sm:$0xff] 0.0
      %56 = vst [vmem:[#allocation7 + $0x8] sm:$0xff] 0.0
      %57 = vst [vmem:[#allocation8] sm:$0xff] 0.0
      %58 = vst [vmem:[#allocation8 + $0x8] sm:$0xff] 0.0
    $region21: #{tpu_custom_call.1} parent=1 // pred_fallthru
      _
    %v59 = vld [vmem:[#allocation2] sm:$0xff]
    %v60 = vld [vmem:[#allocation2 + $0x8] sm:$0xff]
    %v61 = vld [vmem:[#allocation5] sm:$0xff]
    %v62 = vld [vmem:[#allocation5 + $0x8] sm:$0xff]
    %v63 = vmul.f32 %v59, %v61
    %v64 = vmul.f32 %v60, %v62
    %v65 = vadd.f32 %v63, 0.0
    %v66 = vadd.f32 %v64, 0.0
    %v67 = vadd.f32 %v59, 0.0
    %v68 = vadd.f32 %v60, 0.0
    %v69 = vadd.f32 %v67, %v61
    %v70 = vadd.f32 %v68, %v62
    %v71 = vld [vmem:[#allocation7] sm:$0xff]
    %v72 = vld [vmem:[#allocation7 + $0x8] sm:$0xff]
    %v73 = vadd.f32 %v71, %v65
    %v74 = vadd.f32 %v72, %v66
    %75 = vst [vmem:[#allocation7] sm:$0xff] %v73
    %76 = vst [vmem:[#allocation7 + $0x8] sm:$0xff] %v74
    %v77 = vld [vmem:[#allocation8] sm:$0xff]
    %v78 = vld [vmem:[#allocation8 + $0x8] sm:$0xff]
    %v79 = vadd.f32 %v77, %v69
    %v80 = vadd.f32 %v78, %v70
    %81 = vst [vmem:[#allocation8] sm:$0xff] %v79
    %82 = vst [vmem:[#allocation8 + $0x8] sm:$0xff] %v80
    // Predicated region
    $region22: #{tpu_custom_call.1} parent=1 // pred_check
      _
    $region23: #{tpu_custom_call.1} parent=1 // pred_check_branch
      %84 = sbr.rel (0) target = $region25
    $region24: #{tpu_custom_call.1} parent=1 // pred_region
      %s86 = ssub.s32 256, 256
      %87 = vsyncadd [#allocation4], %s86
      %s89 = sshll.u32 [#allocation7], 4
      %s90 = int_to_ptr.vmem [resolvable:$true] %s89
      %92 = dma.vmem_to_hbm [thread:$0]  %s90, 256, %s2, [#allocation4]
    $region25: #{tpu_custom_call.1} parent=1 // pred_fallthru
      _
    // Predicated region
    $region26: #{tpu_custom_call.1} parent=1 // pred_check
      _
    $region27: #{tpu_custom_call.1} parent=1 // pred_check_branch
      %94 = sbr.rel (0) target = $region29
    $region28: #{tpu_custom_call.1} parent=1 // pred_region
      %s96 = ssub.s32 256, 256
      %97 = vsyncadd [#allocation9], %s96
      %s99 = sshll.u32 [#allocation8], 4
      %s100 = int_to_ptr.vmem [resolvable:$true] %s99
      %102 = dma.vmem_to_hbm [thread:$0]  %s100, 256, %s3, [#allocation9]
    $region29: #{tpu_custom_call.1} parent=1 // pred_fallthru
      _
    // Predicated region
    $region30: #{tpu_custom_call.1} parent=1 // pred_check
      _
    $region31: #{tpu_custom_call.1} parent=1 // pred_check_branch
      %104 = sbr.rel (0) target = $region33
    $region32: #{tpu_custom_call.1} parent=1 // pred_region
      %105 = dma.done [#allocation4], 256
    $region33: #{tpu_custom_call.1} parent=1 // pred_fallthru
      _
    // Predicated region
    $region34: #{tpu_custom_call.1} parent=1 // pred_check
      _
    $region35: #{tpu_custom_call.1} parent=1 // pred_check_branch
      %107 = sbr.rel (0) target = $region37
    $region36: #{tpu_custom_call.1} parent=1 // pred_region
      %108 = dma.done [#allocation9], 256
    $region37: #{tpu_custom_call.1} parent=1 // pred_fallthru
      _
    %109 = vsyncpa [#allocation3], 1
    %110 = vsyncpa [#allocation6], 1
    %111 = vsyncpa [#allocation4], 1
    %112 = vsyncpa [#allocation9], 1

</llo_original>
